<compile_context>
chip_gen: v7x
topology: tpu7x:2x2x1
jax: 0.10.0
libtpu: 0.0.40
codegen_flags: <defaults>
</compile_context>

<pallas_src>
import jax
import jax.numpy as jnp
from jax import lax
from jax.experimental import pallas as pl
from jax.experimental.pallas import tpu as pltpu

TEMPERATURE = 0.01


def _vmem_limit_bytes():
    """Generation-aware VMEM limit: ~half of physical (64 MiB on 128-MiB parts
    like v5e/v6e, 32 MiB on v7x's 64-MiB parts)."""
    try:
        cap = int(pltpu.get_tpu_info().vmem_capacity_bytes)
    except Exception:
        cap = 128 * 1024 * 1024
    return min(cap // 2, 64 * 1024 * 1024)


def _pick_blocks(n, d, dtype, vmem_budget):
    """Pick (TM, TN): TN MXU-friendly, TM as large as the budget allows (image
    column tiles are re-read from HBM once per row block), then ensure >= 2 row
    blocks for the megacore-parallel axis."""
    itemsize = jnp.dtype(dtype).itemsize

    def largest_div(cands, default):
        for b in cands:
            if n % b == 0:
                return b
        return default

    tn = largest_div((512, 256, 128), n)   # TODO(synk): pad+mask for ragged N

    def usage(tm_, tn_):
        return (4 * tm_ * d * itemsize      # text + row-aligned image tiles (x2 buffers)
                + 2 * tn_ * d * itemsize    # image column tile (x2 buffers)
                + 3 * 4 * tm_ * tn_         # s / exp blocks (f32)
                + 16 * 4 * (tm_ + tn_))     # accumulators / per-block outputs

    tm = tn
    for cand in (2048, 1024, 512):          # grow TM to cut image HBM re-reads
        if cand > tm and n % cand == 0 and usage(cand, tn) <= vmem_budget:
            tm = cand
            break
    # Shrink if over budget (large D and/or f32 inputs on v7x).
    while usage(tm, tn) > vmem_budget and tm > 128 and n % (tm // 2) == 0:
        tm //= 2
    while usage(tm, tn) > vmem_budget and tn > 128 and n % (tn // 2) == 0:
        tn //= 2
    # v7x megacore: keep at least 2 row blocks on the "parallel" axis.
    while n // tm < 2 and tm >= 16 and (tm // 2) % 8 == 0 and n % (tm // 2) == 0:
        tm //= 2
    return tm, tn


def _infonce_tiled_kernel(t_ref, im_ref, imd_ref,          # (TM,D), (TN,D), (TM,D)
                          row_lse_ref, diag_ref, col_ref,  # outputs
                          m_sc, l_sc):                     # scratch (TM,1) f32 x2
    j = pl.program_id(1)
    nj = pl.num_programs(1)
    inv_tau = jnp.float32(1.0 / TEMPERATURE)

    # ---- per-row-block init (j == 0): reset online-LSE accumulators and emit
    #      the positive-pair logits straight from the inputs (row-aligned image
    #      tile) -- no NxN masks, independent of TM == TN.
    @pl.when(j == 0)
    def _():
        m_sc[...] = jnp.full(m_sc.shape, -jnp.inf, dtype=m_sc.dtype)
        l_sc[...] = jnp.zeros(l_sc.shape, dtype=l_sc.dtype)
        diag_ref[...] = inv_tau * jnp.sum(
            t_ref[...].astype(jnp.float32) * imd_ref[...].astype(jnp.float32),
            axis=-1, keepdims=True)                          # (TM, 1)

    # ---- similarity block on the MXU: contract last dims ('id,jd->ij'),
    #      f32 accumulation; 1/tau applied to the f32 result (VALU has slack,
    #      and this avoids a persistent (TM,D) scaled-text scratch).
    s = inv_tau * lax.dot_general(
        t_ref[...], im_ref[...],
        dimension_numbers=(((1,), (1,)), ((), ())),
        preferred_element_type=jnp.float32,
    )                                                        # (TM, TN) f32

    # ---- row direction (text -> image CE): online logsumexp over col blocks.
    m_prev = m_sc[...]                                       # (TM, 1)
    m_new = jnp.maximum(m_prev, jnp.max(s, axis=-1, keepdims=True))
    p = jnp.exp(s - m_new)                                   # (TM, TN)
    l_sc[...] = (jnp.exp(m_prev - m_new) * l_sc[...]
                 + jnp.sum(p, axis=-1, keepdims=True))
    m_sc[...] = m_new

    @pl.when(j == nj - 1)
    def _():
        row_lse_ref[...] = m_sc[...] + jnp.log(l_sc[...])    # (TM, 1)

    # ---- column direction (image -> text CE): per-column max (numerically
    #      required at tau=0.01 with unnormalized features; a block-scalar max
    #      would underflow f32 exp), second exp, and the cross-sublane row-sum
    #      done on the MXU as a matvec instead of an XLU axis=0 reduce.
    m_col = jnp.max(s, axis=0, keepdims=True)                # (1, TN)
    e_col = jnp.exp(s - m_col)                               # (TM, TN), entries <= 1
    ones = jnp.ones((t_ref.shape[0], 1), dtype=jnp.float32)  # (TM, 1)
    l_col = lax.dot_general(
        ones, e_col,
        dimension_numbers=(((0,), (0,)), ((), ())),
        preferred_element_type=jnp.float32,
    )                                                        # (1, TN) on the MXU
    col_ref[...] = (m_col + jnp.log(l_col)).reshape(col_ref.shape)   # (1,1,TN)


def infonce_loss(image_features, text_features, *, block_rows=None, block_cols=None):
    """image_features, text_features: (N, D) arrays (same dtype). Scalar f32 loss."""
    n, d = image_features.shape
    assert text_features.shape == (n, d)
    assert image_features.dtype == text_features.dtype
    dtype = image_features.dtype

    vmem_limit = _vmem_limit_bytes()
    tm_auto, tn_auto = _pick_blocks(n, d, dtype, int(vmem_limit * 0.85))
    tm = block_rows if block_rows is not None else tm_auto
    tn = block_cols if block_cols is not None else tn_auto
    assert n % tm == 0 and n % tn == 0, (n, tm, tn)
    n_bi, n_bj = n // tm, n // tn

    itemsize = jnp.dtype(dtype).itemsize
    cost = pl.CostEstimate(
        flops=2 * n * n * d + 2 * n * n,          # N x N x D similarity + column matvec
        transcendentals=2 * n * n,                # row-pass exp + column-pass exp
        bytes_accessed=(2 + n_bi) * n * d * itemsize + 4 * (2 * n + n_bi * n),
    )

    grid_spec = pltpu.PrefetchScalarGridSpec(
        num_scalar_prefetch=0,
        grid=(n_bi, n_bj),
        in_specs=[
            pl.BlockSpec((tm, d), lambda i, j: (i, 0)),   # text rows (resident over j)
            pl.BlockSpec((tn, d), lambda i, j: (j, 0)),   # image rows, column block
            pl.BlockSpec((tm, d), lambda i, j: (i, 0)),   # image rows aligned with text rows
        ],
        out_specs=(
            pl.BlockSpec((tm, 1), lambda i, j: (i, 0)),        # row logsumexp
            pl.BlockSpec((tm, 1), lambda i, j: (i, 0)),        # positive-pair logits
            pl.BlockSpec((1, 1, tn), lambda i, j: (i, 0, j)),  # per-row-block column LSE
        ),
        scratch_shapes=[
            pltpu.VMEM((tm, 1), jnp.float32),   # running row max
            pltpu.VMEM((tm, 1), jnp.float32),   # running row sum-exp
        ],
    )

    row_lse, diag, col_part = pl.pallas_call(
        _infonce_tiled_kernel,
        out_shape=(
            jax.ShapeDtypeStruct((n, 1), jnp.float32),
            jax.ShapeDtypeStruct((n, 1), jnp.float32),
            jax.ShapeDtypeStruct((n_bi, 1, n), jnp.float32),
        ),
        grid_spec=grid_spec,
        compiler_params=pltpu.CompilerParams(
            dimension_semantics=("parallel", "arbitrary"),
            vmem_limit_bytes=vmem_limit,
        ),
        cost_estimate=cost,
    )(text_features, image_features, image_features)

    # Tiny O(n_bi * N) epilogue in plain JAX: merge the per-row-block column
    # partial LSEs and take the means.
    col_lse = jax.nn.logsumexp(col_part[:, 0, :], axis=0)            # (N,)
    # 0.5*(CE(sim) + CE(sim.T)) = 0.5*(mean(row_lse)+mean(col_lse)) - mean(diag)
    loss = 0.5 * (jnp.mean(row_lse) + jnp.mean(col_lse)) - jnp.mean(diag)
    return loss.astype(jnp.float32)


def _infonce_loss_ref(image_features, text_features):
    """Pure-JAX reference mirroring the PyTorch forward (world_size=1 path)."""
    sim = jnp.einsum('id,jd->ij',
                     text_features.astype(jnp.float32),
                     image_features.astype(jnp.float32)) / TEMPERATURE
    n = sim.shape[0]
    labels = jnp.arange(n)

    def ce(logits):
        lse = jax.nn.logsumexp(logits, axis=-1)
        pos = logits[jnp.arange(n), labels]
        return jnp.mean(lse - pos)

    return 0.5 * (ce(sim) + ce(sim.T))


if __name__ == "__main__":
    key = jax.random.PRNGKey(0)
    k1, k2, k3, k4 = jax.random.split(key, 4)

    # --- small single-tile case (grid 1x1) ---------------------------------
    N, D = 8, 128
    image_features = jax.random.normal(k1, (N, D), dtype=jnp.float32)
    text_features = jax.random.normal(k2, (N, D), dtype=jnp.float32)

    loss = jax.block_until_ready(infonce_loss(image_features, text_features))
    ref = _infonce_loss_ref(image_features, text_features)
    assert jnp.isfinite(loss), loss
    assert jnp.allclose(loss, ref, rtol=1e-3, atol=0.2), (loss, ref)

    # --- multi-tile, asymmetric TM/TN picked automatically (grid (2, 1)) ---
    N2, D2 = 256, 128
    image2 = jax.random.normal(k3, (N2, D2), dtype=jnp.float32)
    text2 = jax.random.normal(k4, (N2, D2), dtype=jnp.float32)

    loss2 = jax.block_until_ready(infonce_loss(image2, text2))
    ref2 = _infonce_loss_ref(image2, text2)
    assert jnp.isfinite(loss2), loss2
    assert jnp.allclose(loss2, ref2, rtol=1e-3, atol=0.2), (loss2, ref2)

    # --- explicit 2x2 grid exercising both reduction directions ------------
    loss3 = jax.block_until_ready(
        infonce_loss(image2, text2, block_rows=128, block_cols=128))
    assert jnp.isfinite(loss3), loss3
    assert jnp.allclose(loss3, ref2, rtol=1e-3, atol=0.2), (loss3, ref2)

    print("KERNEL_OK")
</pallas_src>

<mosaic_0001>
module attributes {stable_mosaic.version = 11 : i64} {
  func.func @_infonce_tiled_kernel(%arg0: i32, %arg1: i32, %arg2: memref<8x128xf32, #tpu.memory_space<vmem>>, %arg3: memref<8x128xf32, #tpu.memory_space<vmem>>, %arg4: memref<8x128xf32, #tpu.memory_space<vmem>>, %arg5: memref<8x1xf32, #tpu.memory_space<vmem>>, %arg6: memref<8x1xf32, #tpu.memory_space<vmem>>, %arg7: memref<1x1x8xf32, #tpu.memory_space<vmem>>, %arg8: memref<8x1xf32, #tpu.memory_space<vmem>>, %arg9: memref<8x1xf32, #tpu.memory_space<vmem>>) attributes {dimension_semantics = [#tpu.dimension_semantics<parallel>, #tpu.dimension_semantics<arbitrary>], iteration_bounds = array<i64: 1, 1>, scalar_prefetch = 0 : i64, scratch_operands = 2 : i64, tpu.core_type = #tpu.core_type<tc>, window_params = [{transform_indices = @transform_0, window_bounds = array<i64: 8, 128>}, {transform_indices = @transform_1, window_bounds = array<i64: 8, 128>}, {transform_indices = @transform_2, window_bounds = array<i64: 8, 128>}, {transform_indices = @transform_3, window_bounds = array<i64: 8, 1>}, {transform_indices = @transform_4, window_bounds = array<i64: 8, 1>}, {transform_indices = @transform_5, window_bounds = array<i64: 1, 1, 8>}]} {
    %c0_i32 = arith.constant 0 : i32
    %0 = arith.cmpi eq, %arg1, %c0_i32 : i32
    %1 = arith.extui %0 : i1 to i32
    %cst = arith.constant 1.000000e+02 : f32
    %c0_i32_0 = arith.constant 0 : i32
    %2 = arith.cmpi ne, %1, %c0_i32_0 : i32
    scf.if %2 {
      %cst_24 = arith.constant 0xFF800000 : f32
      %38 = vector.broadcast %cst_24 : f32 to vector<8x1xf32>
      %c0_25 = arith.constant 0 : index
      %c0_26 = arith.constant 0 : index
      %39 = vector.load %arg8[%c0_25, %c0_26] : memref<8x1xf32, #tpu.memory_space<vmem>>, vector<8x1xf32>
      tpu.vector_store %arg8[%c0_25, %c0_26], %38 {strides = array<i32>} : memref<8x1xf32, #tpu.memory_space<vmem>>, vector<8x1xf32>,
      %cst_27 = arith.constant 0.000000e+00 : f32
      %40 = vector.broadcast %cst_27 : f32 to vector<8x1xf32>
      %c0_28 = arith.constant 0 : index
      %c0_29 = arith.constant 0 : index
      %41 = vector.load %arg9[%c0_28, %c0_29] : memref<8x1xf32, #tpu.memory_space<vmem>>, vector<8x1xf32>
      tpu.vector_store %arg9[%c0_28, %c0_29], %40 {strides = array<i32>} : memref<8x1xf32, #tpu.memory_space<vmem>>, vector<8x1xf32>,
      %c0_30 = arith.constant 0 : index
      %c0_31 = arith.constant 0 : index
      %42 = vector.load %arg2[%c0_30, %c0_31] : memref<8x128xf32, #tpu.memory_space<vmem>>, vector<8x128xf32>
      %c0_32 = arith.constant 0 : index
      %c0_33 = arith.constant 0 : index
      %43 = vector.load %arg4[%c0_32, %c0_33] : memref<8x128xf32, #tpu.memory_space<vmem>>, vector<8x128xf32>
      %44 = arith.mulf %42, %43 : vector<8x128xf32>
      %cst_34 = arith.constant dense<0.000000e+00> : vector<8xf32>
      %45 = vector.multi_reduction <add>, %44, %cst_34 [1] : vector<8x128xf32> to vector<8xf32>
      %46 = vector.shape_cast %45 : vector<8xf32> to vector<8x1xf32>
      %47 = vector.broadcast %cst : f32 to vector<8x1xf32>
      %48 = arith.mulf %47, %46 : vector<8x1xf32>
      %c0_35 = arith.constant 0 : index
      %c0_36 = arith.constant 0 : index
      %49 = vector.load %arg6[%c0_35, %c0_36] : memref<8x1xf32, #tpu.memory_space<vmem>>, vector<8x1xf32>
      tpu.vector_store %arg6[%c0_35, %c0_36], %48 {strides = array<i32>} : memref<8x1xf32, #tpu.memory_space<vmem>>, vector<8x1xf32>,
    } else {
    }
    %c0 = arith.constant 0 : index
    %c0_1 = arith.constant 0 : index
    %3 = vector.load %arg2[%c0, %c0_1] : memref<8x128xf32, #tpu.memory_space<vmem>>, vector<8x128xf32>
    %c0_2 = arith.constant 0 : index
    %c0_3 = arith.constant 0 : index
    %4 = vector.load %arg3[%c0_2, %c0_3] : memref<8x128xf32, #tpu.memory_space<vmem>>, vector<8x128xf32>
    %cst_4 = arith.constant dense<0.000000e+00> : vector<8x8xf32>
    %5 = tpu.matmul %3, %4, %cst_4 {dimension_numbers = #tpu.dot_dimension_numbers<[1], [1], [0], [0], [0, 0, 1, 0], [], []>} : vector<8x128xf32>, vector<8x128xf32>, vector<8x8xf32> -> vector<8x8xf32>
    %cst_5 = arith.constant 1.000000e+02 : f32
    %6 = vector.broadcast %cst_5 : f32 to vector<8x8xf32>
    %7 = arith.mulf %6, %5 : vector<8x8xf32>
    %c0_6 = arith.constant 0 : index
    %c0_7 = arith.constant 0 : index
    %8 = vector.load %arg8[%c0_6, %c0_7] : memref<8x1xf32, #tpu.memory_space<vmem>>, vector<8x1xf32>
    %cst_8 = arith.constant dense<0xFF800000> : vector<8xf32>
    %9 = vector.multi_reduction <maximumf>, %7, %cst_8 [1] : vector<8x8xf32> to vector<8xf32>
    %10 = vector.shape_cast %9 : vector<8xf32> to vector<8x1xf32>
    %11 = arith.maximumf %8, %10 : vector<8x1xf32>
    %12 = vector.broadcast %11 : vector<8x1xf32> to vector<8x8xf32>
    %13 = arith.subf %7, %12 : vector<8x8xf32>
    %14 = math.exp %13 : vector<8x8xf32>
    %15 = arith.subf %8, %11 : vector<8x1xf32>
    %16 = math.exp %15 : vector<8x1xf32>
    %c0_9 = arith.constant 0 : index
    %c0_10 = arith.constant 0 : index
    %17 = vector.load %arg9[%c0_9, %c0_10] : memref<8x1xf32, #tpu.memory_space<vmem>>, vector<8x1xf32>
    %18 = arith.mulf %16, %17 : vector<8x1xf32>
    %cst_11 = arith.constant dense<0.000000e+00> : vector<8xf32>
    %19 = vector.multi_reduction <add>, %14, %cst_11 [1] : vector<8x8xf32> to vector<8xf32>
    %20 = vector.shape_cast %19 : vector<8xf32> to vector<8x1xf32>
    %21 = arith.addf %18, %20 : vector<8x1xf32>
    %c0_12 = arith.constant 0 : index
    %c0_13 = arith.constant 0 : index
    %22 = vector.load %arg9[%c0_12, %c0_13] : memref<8x1xf32, #tpu.memory_space<vmem>>, vector<8x1xf32>
    tpu.vector_store %arg9[%c0_12, %c0_13], %21 {strides = array<i32>} : memref<8x1xf32, #tpu.memory_space<vmem>>, vector<8x1xf32>,
    %c0_14 = arith.constant 0 : index
    %c0_15 = arith.constant 0 : index
    %23 = vector.load %arg8[%c0_14, %c0_15] : memref<8x1xf32, #tpu.memory_space<vmem>>, vector<8x1xf32>
    tpu.vector_store %arg8[%c0_14, %c0_15], %11 {strides = array<i32>} : memref<8x1xf32, #tpu.memory_space<vmem>>, vector<8x1xf32>,
    %c0_i32_16 = arith.constant 0 : i32
    %24 = arith.cmpi eq, %arg1, %c0_i32_16 : i32
    %25 = arith.extui %24 : i1 to i32
    %c0_i32_17 = arith.constant 0 : i32
    %26 = arith.cmpi ne, %25, %c0_i32_17 : i32
    scf.if %26 {
      %c0_24 = arith.constant 0 : index
      %c0_25 = arith.constant 0 : index
      %38 = vector.load %arg8[%c0_24, %c0_25] : memref<8x1xf32, #tpu.memory_space<vmem>>, vector<8x1xf32>
      %c0_26 = arith.constant 0 : index
      %c0_27 = arith.constant 0 : index
      %39 = vector.load %arg9[%c0_26, %c0_27] : memref<8x1xf32, #tpu.memory_space<vmem>>, vector<8x1xf32>
      %40 = math.log %39 : vector<8x1xf32>
      %41 = arith.addf %38, %40 : vector<8x1xf32>
      %c0_28 = arith.constant 0 : index
      %c0_29 = arith.constant 0 : index
      %42 = vector.load %arg5[%c0_28, %c0_29] : memref<8x1xf32, #tpu.memory_space<vmem>>, vector<8x1xf32>
      tpu.vector_store %arg5[%c0_28, %c0_29], %41 {strides = array<i32>} : memref<8x1xf32, #tpu.memory_space<vmem>>, vector<8x1xf32>,
    } else {
    }
    %cst_18 = arith.constant dense<0xFF800000> : vector<8xf32>
    %27 = vector.multi_reduction <maximumf>, %7, %cst_18 [0] : vector<8x8xf32> to vector<8xf32>
    %28 = vector.shape_cast %27 : vector<8xf32> to vector<1x8xf32>
    %29 = vector.broadcast %28 : vector<1x8xf32> to vector<8x8xf32>
    %30 = arith.subf %7, %29 : vector<8x8xf32>
    %31 = math.exp %30 : vector<8x8xf32>
    %cst_19 = arith.constant 1.000000e+00 : f32
    %32 = vector.broadcast %cst_19 : f32 to vector<8x1xf32>
    %cst_20 = arith.constant dense<0.000000e+00> : vector<1x8xf32>
    %33 = tpu.matmul %32, %31, %cst_20 {dimension_numbers = #tpu.dot_dimension_numbers<[0], [0], [1], [1], [0, 1, 1, 1], [], []>} : vector<8x1xf32>, vector<8x8xf32>, vector<1x8xf32> -> vector<1x8xf32>
    %34 = math.log %33 : vector<1x8xf32>
    %35 = arith.addf %28, %34 : vector<1x8xf32>
    %36 = vector.shape_cast %35 : vector<1x8xf32> to vector<1x1x8xf32>
    %c0_21 = arith.constant 0 : index
    %c0_22 = arith.constant 0 : index
    %c0_23 = arith.constant 0 : index
    %37 = vector.load %arg7[%c0_21, %c0_22, %c0_23] : memref<1x1x8xf32, #tpu.memory_space<vmem>>, vector<1x1x8xf32>
    tpu.vector_store %arg7[%c0_21, %c0_22, %c0_23], %36 {strides = array<i32>} : memref<1x1x8xf32, #tpu.memory_space<vmem>>, vector<1x1x8xf32>,
    return
  }
  func.func @transform_0(%arg0: i32, %arg1: i32) -> (i32, i32) {
    %c0_i32 = arith.constant 0 : i32
    %c0_i32_0 = arith.constant 0 : i32
    return %arg0, %c0_i32 : i32, i32
  }
  func.func @transform_1(%arg0: i32, %arg1: i32) -> (i32, i32) {
    %c0_i32 = arith.constant 0 : i32
    %c0_i32_0 = arith.constant 0 : i32
    return %arg1, %c0_i32 : i32, i32
  }
  func.func @transform_2(%arg0: i32, %arg1: i32) -> (i32, i32) {
    %c0_i32 = arith.constant 0 : i32
    %c0_i32_0 = arith.constant 0 : i32
    return %arg0, %c0_i32 : i32, i32
  }
  func.func @transform_3(%arg0: i32, %arg1: i32) -> (i32, i32) {
    %c0_i32 = arith.constant 0 : i32
    %c0_i32_0 = arith.constant 0 : i32
    return %arg0, %c0_i32 : i32, i32
  }
  func.func @transform_4(%arg0: i32, %arg1: i32) -> (i32, i32) {
    %c0_i32 = arith.constant 0 : i32
    %c0_i32_0 = arith.constant 0 : i32
    return %arg0, %c0_i32 : i32, i32
  }
  func.func @transform_5(%arg0: i32, %arg1: i32) -> (i32, i32, i32) {
    %c0_i32 = arith.constant 0 : i32
    %c0_i32_0 = arith.constant 0 : i32
    return %arg0, %c0_i32, %arg1 : i32, i32, i32
  }
}

</mosaic_0001>

<llo_original>
// kernel: tpu_custom_call.1
$region0: #{tpu_custom_call.1}
  #allocation0 [shape = 'u32[]', space=smem, size = 0x4, offset = 0x4, fixed_abs, tag = 'smem constant byte address 0x4 - core index']
  #allocation1 [shape = 'u32[144,128]{1,0:T(1,128)}', space=vmem, size = 0x12000, scoped, tag = 'internal scratch']
  #allocation2 [shape = 'f32[8,1]{1,0:T(8,128)}', space=vmem, size = 0x1000, scoped, tag = 'scratch operand']
  #allocation3 [shape = 'f32[8,1]{1,0:T(8,128)}', space=vmem, size = 0x1000, scoped, tag = 'scratch operand']
  %s0 = inlined_call_operand.hbm [shape: f32[8,128], index: 0, kind: input, shape index: {}]
  %s1 = inlined_call_operand.hbm [shape: f32[8,128], index: 1, kind: input, shape index: {}]
  %s2 = inlined_call_operand.hbm [shape: f32[8,128], index: 2, kind: input, shape index: {}]
  %s3 = inlined_call_operand.hbm [shape: f32[8,1], index: 3, kind: output, shape index: {0}]
  %s4 = inlined_call_operand.hbm [shape: f32[8,1], index: 4, kind: output, shape index: {1}]
  %s5 = inlined_call_operand.hbm [shape: f32[1,1,8], index: 5, kind: output, shape index: {2}]
  %6 = xla_tuple %s3, %s4, %s5
  %s7 = sld [smem:[#allocation0]]
  $region58: #{tpu_custom_call.1} parent=0
    _
  %s9 = ssub.s32 1, %s7
  %s10 = scalar_select 0, %s9, %s7
  $region1: #{tpu_custom_call.1} parent=0
    #allocation4 [shape = 'u8[4096]{0}', space=vmem, size = 0x1000, scoped, tag = 'input window, operand 0, single buffered']
    #allocation5 [shape = 's32[1]{0}', space=sflag, size = 0x4, scoped, tag = 'scoped memory for tpu_custom_call.1']
    #allocation6 [shape = 's32[1]{0}', space=sflag, size = 0x4, scoped, tag = 'scoped memory for tpu_custom_call.1']
    #allocation7 [shape = 'u8[4096]{0}', space=vmem, size = 0x1000, scoped, tag = 'input window, operand 1, single buffered']
    #allocation8 [shape = 's32[1]{0}', space=sflag, size = 0x4, scoped, tag = 'scoped memory for tpu_custom_call.1']
    #allocation9 [shape = 'u8[4096]{0}', space=vmem, size = 0x1000, scoped, tag = 'input window, operand 2, single buffered']
    #allocation10 [shape = 'u8[4096]{0}', space=vmem, size = 0x1000, scoped, tag = 'output window, operand 0, single buffered']
    #allocation11 [shape = 'u8[4096]{0}', space=vmem, size = 0x1000, scoped, tag = 'output window, operand 1, single buffered']
    #allocation12 [shape = 's32[1]{0}', space=sflag, size = 0x4, scoped, tag = 'scoped memory for tpu_custom_call.1']
    #allocation13 [shape = 'u8[512]{0}', space=vmem, size = 0x400, scoped, tag = 'output window, operand 2, single buffered']
    %11 = vsyncpa [#allocation5], 0
    %12 = vsyncpa [#allocation8], 0
    %13 = vsyncpa [#allocation6], 0
    %14 = vsyncpa [#allocation12], 0
    // Predicated region
    $region2: #{tpu_custom_call.1} parent=1 // pred_check
      _
    $region3: #{tpu_custom_call.1} parent=1 // pred_check_branch
      %16 = sbr.rel (0) target = $region5
    $region4: #{tpu_custom_call.1} parent=1 // pred_region
      %s18 = ssub.s32 128, 128
      %19 = vsyncadd [#allocation5], %s18
      %s21 = sshll.u32 [#allocation4], 4
      %s22 = int_to_ptr.vmem [resolvable:$true] %s21
      %24 = dma.hbm_to_vmem [thread:$0]  %s0, 128, %s22, [#allocation5]
    $region5: #{tpu_custom_call.1} parent=1 // pred_fallthru
      _
    // Predicated region
    $region6: #{tpu_custom_call.1} parent=1 // pred_check
      _
    $region7: #{tpu_custom_call.1} parent=1 // pred_check_branch
      %26 = sbr.rel (0) target = $region9
    $region8: #{tpu_custom_call.1} parent=1 // pred_region
      %s28 = ssub.s32 128, 128
      %29 = vsyncadd [#allocation8], %s28
      %s31 = sshll.u32 [#allocation7], 4
      %s32 = int_to_ptr.vmem [resolvable:$true] %s31
      %34 = dma.hbm_to_vmem [thread:$0]  %s1, 128, %s32, [#allocation8]
    $region9: #{tpu_custom_call.1} parent=1 // pred_fallthru
      _
    // Predicated region
    $region10: #{tpu_custom_call.1} parent=1 // pred_check
      _
    $region11: #{tpu_custom_call.1} parent=1 // pred_check_branch
      %36 = sbr.rel (0) target = $region13
    $region12: #{tpu_custom_call.1} parent=1 // pred_region
      %s38 = ssub.s32 128, 128
      %39 = vsyncadd [#allocation8], %s38
      %s41 = sshll.u32 [#allocation9], 4
      %s42 = int_to_ptr.vmem [resolvable:$true] %s41
      %44 = dma.hbm_to_vmem [thread:$0]  %s2, 128, %s42, [#allocation8]
    $region13: #{tpu_custom_call.1} parent=1 // pred_fallthru
      _
    // Predicated region
    $region14: #{tpu_custom_call.1} parent=1 // pred_check
      _
    $region15: #{tpu_custom_call.1} parent=1 // pred_check_branch
      %46 = sbr.rel (0) target = $region17
    $region16: #{tpu_custom_call.1} parent=1 // pred_region
      %47 = dma.done [#allocation5], 128
    $region17: #{tpu_custom_call.1} parent=1 // pred_fallthru
      _
    // Predicated region
    $region18: #{tpu_custom_call.1} parent=1 // pred_check
      _
    $region19: #{tpu_custom_call.1} parent=1 // pred_check_branch
      %49 = sbr.rel (0) target = $region21
    $region20: #{tpu_custom_call.1} parent=1 // pred_region
      %50 = dma.done [#allocation8], 128
    $region21: #{tpu_custom_call.1} parent=1 // pred_fallthru
      _
    // Predicated region
    $region22: #{tpu_custom_call.1} parent=1 // pred_check
      _
    $region23: #{tpu_custom_call.1} parent=1 // pred_check_branch
      %52 = sbr.rel (0) target = $region25
    $region24: #{tpu_custom_call.1} parent=1 // pred_region
      %53 = dma.done [#allocation8], 128
    $region25: #{tpu_custom_call.1} parent=1 // pred_fallthru
      _
    %p54 = scmp.eq.s32.totalorder 0, 0
    // Predicated region
    $region26: #{tpu_custom_call.1} parent=1 // pred_check
      %p55 = pneg %p54
    $region27: #{tpu_custom_call.1} parent=1 // pred_check_branch
      %57 = sbr.rel (%p55) target = $region29
    $region28: #{tpu_custom_call.1} parent=1 // pred_region
      %vm58 = vcmask 7168
      %59 = vst.msk [vmem:[#allocation2] sm:$0xff] %vm58, -inf
      %60 = vst.msk [vmem:[#allocation3] sm:$0xff] %vm58, 0.0
      %v61 = vld [vmem:[#allocation4] sm:$0xff]
      %v62 = vld [vmem:[#allocation9] sm:$0xff]
      %v63 = vmul.f32 %v61, %v62
      %64 = vadd.xlane.f32.xlu0 %v63
      %v65 = vpop.xlane.xlu0 %64
      %v66 = vmul.f32 %v65, 100.0
      %67 = vst.msk [vmem:[#allocation11] sm:$0xff] %vm58, %v66
    $region29: #{tpu_custom_call.1} parent=1 // pred_fallthru
      _
    %v68 = vld [vmem:[#allocation4] sm:$0xff]
    %v69 = vld [vmem:[#allocation7] sm:$0xff]
    %70 = vmatprep.subr.mxu0 0.0
    %71 = vmatpush1.xpose.msra.mxu0 %v69
    %72 = vmatprep.subr.mxu0 0.0
    %73 = vmatpush1.xpose.msra.mxu0 0.0
    %74 = vmatprep.subr.mxu0 0.0
    %75 = vmatpush1.xpose.msra.mxu0 0.0
    %76 = vmatprep.subr.mxu0 0.0
    %77 = vmatpush1.xpose.msra.mxu0 0.0
    %78 = vmatprep.subr.mxu0 0.0
    %79 = vmatpush1.xpose.msra.mxu0 0.0
    %80 = vmatprep.subr.mxu0 0.0
    %81 = vmatpush1.xpose.msra.mxu0 0.0
    %82 = vmatprep.subr.mxu0 0.0
    %83 = vmatpush1.xpose.msra.mxu0 0.0
    %84 = vmatprep.subr.mxu0 0.0
    %85 = vmatpush1.xpose.msra.mxu0 0.0
    %86 = vmatprep.subr.mxu0 0.0
    %87 = vmatpush1.xpose.msra.mxu0 0.0
    %88 = vmatprep.subr.mxu0 0.0
    %89 = vmatpush1.xpose.msra.mxu0 0.0
    %90 = vmatprep.subr.mxu0 0.0
    %91 = vmatpush1.xpose.msra.mxu0 0.0
    %92 = vmatprep.subr.mxu0 0.0
    %93 = vmatpush1.xpose.msra.mxu0 0.0
    %94 = vmatprep.subr.mxu0 0.0
    %95 = vmatpush1.xpose.msra.mxu0 0.0
    %96 = vmatprep.subr.mxu0 0.0
    %97 = vmatpush1.xpose.msra.mxu0 0.0
    %98 = vmatprep.subr.mxu0 0.0
    %99 = vmatpush1.xpose.msra.mxu0 0.0
    %100 = vmatprep.subr.mxu0 0.0
    %101 = vmatpush1.xpose.msra.mxu0 0.0
    %102 = vmatprep.subr.mxu0 0.0
    %103 = vmatpush1.xpose.msra.mxu0 0.0
    %104 = vmatprep.subr.mxu0 0.0
    %105 = vmatpush1.xpose.msra.mxu0 0.0
    %106 = vmatprep.subr.mxu0 0.0
    %107 = vmatpush1.xpose.msra.mxu0 0.0
    %108 = vmatprep.subr.mxu0 0.0
    %109 = vmatpush1.xpose.msra.mxu0 0.0
    %110 = vmatprep.subr.mxu0 0.0
    %111 = vmatpush1.xpose.msra.mxu0 0.0
    %112 = vmatprep.subr.mxu0 0.0
    %113 = vmatpush1.xpose.msra.mxu0 0.0
    %114 = vmatprep.subr.mxu0 0.0
    %115 = vmatpush1.xpose.msra.mxu0 0.0
    %116 = vmatprep.subr.mxu0 0.0
    %117 = vmatpush1.xpose.msra.mxu0 0.0
    %118 = vmatprep.subr.mxu0 0.0
    %119 = vmatpush1.xpose.msra.mxu0 0.0
    %120 = vmatprep.subr.mxu0 0.0
    %121 = vmatpush1.xpose.msra.mxu0 0.0
    %122 = vmatprep.subr.mxu0 0.0
    %123 = vmatpush1.xpose.msra.mxu0 0.0
    %124 = vmatprep.subr.mxu0 0.0
    %125 = vmatpush1.xpose.msra.mxu0 0.0
    %126 = vmatprep.subr.mxu0 0.0
    %127 = vmatpush1.xpose.msra.mxu0 0.0
    %128 = vmatprep.subr.mxu0 0.0
    %129 = vmatpush1.xpose.msra.mxu0 0.0
    %130 = vmatprep.subr.mxu0 0.0
    %131 = vmatpush1.xpose.msra.mxu0 0.0
    %132 = vmatprep.subr.mxu0 0.0
    %133 = vmatpush1.xpose.msra.mxu0 0.0
    %134 = vmatprep.mubr.f32.mxu0 0.0
    %135 = vmatmul.mubr.f32.gmra.mrb[0].mxu0 %v68
    %v136 = vpop.f32.mrb[0].mxu0
    %v137 = vadd.f32 0.0, %v136
    %v138 = vpop.f32.mrb[0].mxu0
    %139 = vdwg.mxu0
    %v140 = vmul.f32 %v137, 100.0
    %v141 = vld [vmem:[#allocation2] sm:$0xff]
    %vm142 = vcmask 64512
    %v143 = vsel %vm142, %v140, -inf
    %144 = vmax.xlane.f32.xlu0 %v143
    %v145 = vpop.xlane.xlu0 %144
    %v146 = vmax.f32 %v141, %v145
    %148 = vset.pattern.permute.xlu0 0
    %149 = vperm.xlu0 %148, %v146
    %v150 = vpop.permute.xlu0 %149
    %v152 = vsub.f32 %v140, %v150
    %v153 = vmul.f32 %v152, 1.442695
    %v154 = vpow.pop %v153
    %v155 = vsub.f32 %v141, %v146
    %v156 = vmul.f32 %v155, 1.442695
    %v157 = vpow.pop %v156
    %v158 = vld [vmem:[#allocation3] sm:$0xff]
    %v159 = vmul.f32 %v157, %v158
    %v160 = vsel %vm142, %v154, 0.0
    %161 = vadd.xlane.f32.xlu0 %v160
    %v162 = vpop.xlane.xlu0 %161
    %v163 = vadd.f32 %v159, %v162
    %vm164 = vcmask 7168
    %165 = vst.msk [vmem:[#allocation3] sm:$0xff] %vm164, %v163
    %166 = vst.msk [vmem:[#allocation2] sm:$0xff] %vm164, %v146
    // Predicated region
    $region30: #{tpu_custom_call.1} parent=1 // pred_check
      %p167 = pneg %p54
    $region31: #{tpu_custom_call.1} parent=1 // pred_check_branch
      %169 = sbr.rel (%p167) target = $region33
    $region32: #{tpu_custom_call.1} parent=1 // pred_region
      %v170 = vld [vmem:[#allocation2] sm:$0xff]
      %v171 = vld [vmem:[#allocation3] sm:$0xff]
      %v172 = vlog2.pop %v171
      %v173 = vmul.f32 %v172, 0.6931472
      %v174 = vadd.f32 %v170, %v173
      %175 = vst.msk [vmem:[#allocation10] sm:$0xff] %vm164, %v174
    $region33: #{tpu_custom_call.1} parent=1 // pred_fallthru
      _
    %v176 = vrot.slane %v143, 4
    %v177 = vmax.f32 %v143, %v176
    %v178 = vrot.slane %v177, 2
    %v179 = vmax.f32 %v177, %v178
    %v180 = vrot.slane %v179, 1
    %v181 = vmax.f32 %v179, %v180
    %v182 = vsub.f32 %v140, %v181
    %v183 = vmul.f32 %v182, 1.442695
    %v184 = vpow.pop %v183
    %185 = vxpose.xlu0.b32.start [1/16] 1.0, 128
    %186 = vxpose.xlu0.b32.cont [2/16] 0.0, 128
    %187 = vxpose.xlu0.b32.cont [3/16] 0.0, 128
    %188 = vxpose.xlu0.b32.cont [4/16] 0.0, 128
    %189 = vxpose.xlu0.b32.cont [5/16] 0.0, 128
    %190 = vxpose.xlu0.b32.cont [6/16] 0.0, 128
    %191 = vxpose.xlu0.b32.cont [7/16] 0.0, 128
    %192 = vxpose.xlu0.b32.cont [8/16] 0.0, 128
    %193 = vxpose.xlu0.b32.cont [9/16] 0.0, 128
    %194 = vxpose.xlu0.b32.cont [10/16] 0.0, 128
    %195 = vxpose.xlu0.b32.cont [11/16] 0.0, 128
    %196 = vxpose.xlu0.b32.cont [12/16] 0.0, 128
    %197 = vxpose.xlu0.b32.cont [13/16] 0.0, 128
    %198 = vxpose.xlu0.b32.cont [14/16] 0.0, 128
    %199 = vxpose.xlu0.b32.cont [15/16] 0.0, 128
    %200 = vxpose.xlu0.b32.end [16/16] 0.0, 128
    %v201 = vpop.trf.xlu0
    %v202 = vpop.trf.xlu0
    %v203 = vpop.trf.xlu0
    %v204 = vpop.trf.xlu0
    %v205 = vpop.trf.xlu0
    %v206 = vpop.trf.xlu0
    %v207 = vpop.trf.xlu0
    %v208 = vpop.trf.xlu0
    %v209 = vpop.trf.xlu0
    %v210 = vpop.trf.xlu0
    %v211 = vpop.trf.xlu0
    %v212 = vpop.trf.xlu0
    %v213 = vpop.trf.xlu0
    %v214 = vpop.trf.xlu0
    %v215 = vpop.trf.xlu0
    %v216 = vpop.trf.xlu0
    %v218 = vsel %vm142, %v201, 0
    %220 = vmatprep.subr.mxu0 0.0
    %221 = vmatpush1.msra.mxu0 %v184
    %222 = vmatprep.subr.mxu0 0.0
    %223 = vmatpush1.msra.mxu0 0.0
    %224 = vmatprep.subr.mxu0 0.0
    %225 = vmatpush1.msra.mxu0 0.0
    %226 = vmatprep.subr.mxu0 0.0
    %227 = vmatpush1.msra.mxu0 0.0
    %228 = vmatprep.subr.mxu0 0.0
    %229 = vmatpush1.msra.mxu0 0.0
    %230 = vmatprep.subr.mxu0 0.0
    %231 = vmatpush1.msra.mxu0 0.0
    %232 = vmatprep.subr.mxu0 0.0
    %233 = vmatpush1.msra.mxu0 0.0
    %234 = vmatprep.subr.mxu0 0.0
    %235 = vmatpush1.msra.mxu0 0.0
    %236 = vmatprep.subr.mxu0 0.0
    %237 = vmatpush1.msra.mxu0 0.0
    %238 = vmatprep.subr.mxu0 0.0
    %239 = vmatpush1.msra.mxu0 0.0
    %240 = vmatprep.subr.mxu0 0.0
    %241 = vmatpush1.msra.mxu0 0.0
    %242 = vmatprep.subr.mxu0 0.0
    %243 = vmatpush1.msra.mxu0 0.0
    %244 = vmatprep.subr.mxu0 0.0
    %245 = vmatpush1.msra.mxu0 0.0
    %246 = vmatprep.subr.mxu0 0.0
    %247 = vmatpush1.msra.mxu0 0.0
    %248 = vmatprep.subr.mxu0 0.0
    %249 = vmatpush1.msra.mxu0 0.0
    %250 = vmatprep.subr.mxu0 0.0
    %251 = vmatpush1.msra.mxu0 0.0
    %252 = vmatprep.subr.mxu0 0.0
    %253 = vmatpush1.msra.mxu0 0.0
    %254 = vmatprep.subr.mxu0 0.0
    %255 = vmatpush1.msra.mxu0 0.0
    %256 = vmatprep.subr.mxu0 0.0
    %257 = vmatpush1.msra.mxu0 0.0
    %258 = vmatprep.subr.mxu0 0.0
    %259 = vmatpush1.msra.mxu0 0.0
    %260 = vmatprep.subr.mxu0 0.0
    %261 = vmatpush1.msra.mxu0 0.0
    %262 = vmatprep.subr.mxu0 0.0
    %263 = vmatpush1.msra.mxu0 0.0
    %264 = vmatprep.subr.mxu0 0.0
    %265 = vmatpush1.msra.mxu0 0.0
    %266 = vmatprep.subr.mxu0 0.0
    %267 = vmatpush1.msra.mxu0 0.0
    %268 = vmatprep.subr.mxu0 0.0
    %269 = vmatpush1.msra.mxu0 0.0
    %270 = vmatprep.subr.mxu0 0.0
    %271 = vmatpush1.msra.mxu0 0.0
    %272 = vmatprep.subr.mxu0 0.0
    %273 = vmatpush1.msra.mxu0 0.0
    %274 = vmatprep.subr.mxu0 0.0
    %275 = vmatpush1.msra.mxu0 0.0
    %276 = vmatprep.subr.mxu0 0.0
    %277 = vmatpush1.msra.mxu0 0.0
    %278 = vmatprep.subr.mxu0 0.0
    %279 = vmatpush1.msra.mxu0 0.0
    %280 = vmatprep.subr.mxu0 0.0
    %281 = vmatpush1.msra.mxu0 0.0
    %282 = vmatprep.subr.mxu0 0.0
    %283 = vmatpush1.msra.mxu0 0.0
    %284 = vmatprep.mubr.f32.mxu0 0.0
    %285 = vmatmul.mubr.f32.gmra.mrb[0].mxu0 %v218
    %v286 = vpop.f32.mrb[0].mxu0
    %v287 = vadd.f32 0.0, %v286
    %v288 = vpop.f32.mrb[0].mxu0
    %289 = vdwg.mxu0
    %v290 = vlog2.pop %v287
    %v291 = vmul.f32 %v290, 0.6931472
    %v292 = vadd.f32 %v181, %v291
    %vm293 = vcmask 57344
    %294 = vst.msk [vmem:[#allocation13] sm:$0x1] %vm293, %v292
    // Predicated region
    $region34: #{tpu_custom_call.1} parent=1 // pred_check
      _
    $region35: #{tpu_custom_call.1} parent=1 // pred_check_branch
      %296 = sbr.rel (0) target = $region37
    $region36: #{tpu_custom_call.1} parent=1 // pred_region
      %s298 = ssub.s32 128, 128
      %299 = vsyncadd [#allocation6], %s298
      %s301 = sshll.u32 [#allocation10], 4
      %s302 = int_to_ptr.vmem [resolvable:$true] %s301
      %304 = dma.vmem_to_hbm [thread:$0]  %s302, 128, %s3, [#allocation6]
    $region37: #{tpu_custom_call.1} parent=1 // pred_fallthru
      _
    // Predicated region
    $region38: #{tpu_custom_call.1} parent=1 // pred_check
      _
    $region39: #{tpu_custom_call.1} parent=1 // pred_check_branch
      %306 = sbr.rel (0) target = $region41
    $region40: #{tpu_custom_call.1} parent=1 // pred_region
      %s308 = ssub.s32 128, 128
      %309 = vsyncadd [#allocation12], %s308
      %s311 = sshll.u32 [#allocation11], 4
      %s312 = int_to_ptr.vmem [resolvable:$true] %s311
      %314 = dma.vmem_to_hbm [thread:$0]  %s312, 128, %s4, [#allocation12]
    $region41: #{tpu_custom_call.1} parent=1 // pred_fallthru
      _
    // Predicated region
    $region42: #{tpu_custom_call.1} parent=1 // pred_check
      _
    $region43: #{tpu_custom_call.1} parent=1 // pred_check_branch
      %316 = sbr.rel (0) target = $region45
    $region44: #{tpu_custom_call.1} parent=1 // pred_region
      %s318 = ssub.s32 16, 16
      %319 = vsyncadd [#allocation12], %s318
      %s321 = sshll.u32 [#allocation13], 4
      %s322 = int_to_ptr.vmem [resolvable:$true] %s321
      %324 = dma.vmem_to_hbm [thread:$0]  %s322, 16, %s5, [#allocation12]
    $region45: #{tpu_custom_call.1} parent=1 // pred_fallthru
      _
    // Predicated region
    $region46: #{tpu_custom_call.1} parent=1 // pred_check
      _
    $region47: #{tpu_custom_call.1} parent=1 // pred_check_branch
      %326 = sbr.rel (0) target = $region49
    $region48: #{tpu_custom_call.1} parent=1 // pred_region
      %327 = dma.done [#allocation6], 128
    $region49: #{tpu_custom_call.1} parent=1 // pred_fallthru
      _
    // Predicated region
    $region50: #{tpu_custom_call.1} parent=1 // pred_check
      _
    $region51: #{tpu_custom_call.1} parent=1 // pred_check_branch
      %329 = sbr.rel (0) target = $region53
    $region52: #{tpu_custom_call.1} parent=1 // pred_region
      %330 = dma.done [#allocation12], 128
    $region53: #{tpu_custom_call.1} parent=1 // pred_fallthru
      _
    // Predicated region
    $region54: #{tpu_custom_call.1} parent=1 // pred_check
      _
    $region55: #{tpu_custom_call.1} parent=1 // pred_check_branch
      %332 = sbr.rel (0) target = $region57
    $region56: #{tpu_custom_call.1} parent=1 // pred_region
      %333 = dma.done [#allocation12], 16
    $region57: #{tpu_custom_call.1} parent=1 // pred_fallthru
      _
    %334 = vsyncpa [#allocation5], 1
    %335 = vsyncpa [#allocation8], 1
    %336 = vsyncpa [#allocation6], 1
    %337 = vsyncpa [#allocation12], 1

</llo_original>
